<compile_context>
chip_gen: v7x
topology: tpu7x:2x2x1
jax: 0.10.0
libtpu: 0.0.40
codegen_flags: <defaults>
</compile_context>

<pallas_src>
import math
import jax
import jax.numpy as jnp
from jax import lax
from jax.experimental import pallas as pl
from jax.experimental.pallas import tpu as pltpu


def _sigmoid(z):
    # Explicit exp-based sigmoid (EUP exp + VPU); avoids relying on logistic lowering.
    return 1.0 / (1.0 + jnp.exp(-z))


def lstm_clf_kernel(x_ref, wih1_ref, whh1_ref, b1_ref,
                    wih2_ref, whh2_ref, b2_ref,
                    wclf_ref, bclf_ref, h0_ref, c0_ref,
                    pred_ref, out_ref, hn_ref, cn_ref,
                    gates_ref, h1_ref):
    N = x_ref.shape[0]
    H = whh1_ref.shape[0]

    def lstm_cell(h, c, g):
        # g: (1, 4H) gate pre-activations, PyTorch order [i | f | g | o]
        i = _sigmoid(g[:, 0 * H:1 * H])
        f = _sigmoid(g[:, 1 * H:2 * H])
        gg = jnp.tanh(g[:, 2 * H:3 * H])
        o = _sigmoid(g[:, 3 * H:4 * H])
        c_new = f * c + i * gg
        h_new = o * jnp.tanh(c_new)
        return h_new, c_new

    # ---- Layer 1: input projection batched over the whole sequence (one MXU matmul) ----
    gates_ref[...] = (
        jnp.dot(x_ref[...], wih1_ref[...], preferred_element_type=jnp.float32)
        + b1_ref[...])

    def step1(t, carry):
        h, c = carry
        g = gates_ref[pl.ds(t, 1), :] + jnp.dot(
            h, whh1_ref[...], preferred_element_type=jnp.float32)
        h, c = lstm_cell(h, c, g)
        h1_ref[pl.ds(t, 1), :] = h
        return (h, c)

    h1_fin, c1_fin = lax.fori_loop(0, N, step1, (h0_ref[0:1, :], c0_ref[0:1, :]))

    # ---- Layer 2: same trick on the layer-1 outputs ----
    # TODO(synk): nn.LSTM(dropout=1) applies dropout between layers only in training
    # mode; eval/inference semantics (identity) are implemented here.
    gates_ref[...] = (
        jnp.dot(h1_ref[...], wih2_ref[...], preferred_element_type=jnp.float32)
        + b2_ref[...])

    def step2(t, carry):
        h, c = carry
        g = gates_ref[pl.ds(t, 1), :] + jnp.dot(
            h, whh2_ref[...], preferred_element_type=jnp.float32)
        h, c = lstm_cell(h, c, g)
        out_ref[pl.ds(t, 1), :] = h
        return (h, c)

    h2_fin, c2_fin = lax.fori_loop(0, N, step2, (h0_ref[1:2, :], c0_ref[1:2, :]))

    # Updated hidden state (what the PyTorch module writes into self.hidden).
    hn_ref[0:1, :] = h1_fin
    hn_ref[1:2, :] = h2_fin
    cn_ref[0:1, :] = c1_fin
    cn_ref[1:2, :] = c2_fin

    # ---- Classifier head: pred = lstm_out @ W_clf + b_clf (one MXU matmul) ----
    pred_ref[...] = (
        jnp.dot(out_ref[...], wclf_ref[...], preferred_element_type=jnp.float32)
        + bclf_ref[...]).astype(pred_ref.dtype)


def model_forward(x, params, hidden):
    """Pallas forward of the deepjazz Model.

    x: (N, input_dim) float32 (the PyTorch forward views it as (N, 1, input_dim))
    hidden: (h0, c0), each (n_layer=2, 1, hidden_dim)
    returns (pred (N, output_dim), lstm_out (N, 1, hidden_dim), (h_n, c_n))
    """
    N, _ = x.shape
    H = params["w_hh1"].shape[0]
    O = params["w_clf"].shape[1]
    h0, c0 = hidden
    h0 = h0.reshape(2, H).astype(jnp.float32)
    c0 = c0.reshape(2, H).astype(jnp.float32)

    vmem = pl.BlockSpec(memory_space=pltpu.MemorySpace.VMEM)

    pred, lstm_out, h_n, c_n = pl.pallas_call(
        lstm_clf_kernel,
        out_shape=(
            jax.ShapeDtypeStruct((N, O), jnp.float32),   # pred
            jax.ShapeDtypeStruct((N, H), jnp.float32),   # lstm_out (layer-2 h_t)
            jax.ShapeDtypeStruct((2, H), jnp.float32),   # h_n
            jax.ShapeDtypeStruct((2, H), jnp.float32),   # c_n
        ),
        in_specs=[vmem] * 11,
        out_specs=(vmem, vmem, vmem, vmem),
        scratch_shapes=[
            pltpu.VMEM((N, 4 * H), jnp.float32),  # gate pre-activations (reused per layer)
            pltpu.VMEM((N, H), jnp.float32),      # layer-1 hidden outputs
        ],
    )(x, params["w_ih1"], params["w_hh1"], params["b1"],
      params["w_ih2"], params["w_hh2"], params["b2"],
      params["w_clf"], params["b_clf"], h0, c0)

    # Match PyTorch output shapes: lstm_out (N, 1, H); hidden states (2, 1, H).
    return pred, lstm_out.reshape(N, 1, H), (h_n.reshape(2, 1, H), c_n.reshape(2, 1, H))


def init_params(key, input_dim, hidden_dim, output_dim):
    """Mirror PyTorch defaults: LSTM weights/biases ~ U(-1/sqrt(H), 1/sqrt(H)),
    nn.Linear ~ U(-1/sqrt(fan_in), 1/sqrt(fan_in)); b_ih + b_hh pre-combined."""
    ks = jax.random.split(key, 10)
    H = hidden_dim
    bl = 1.0 / math.sqrt(H)
    u = lambda k, shape, b: jax.random.uniform(k, shape, jnp.float32, -b, b)
    return {
        "w_ih1": u(ks[0], (input_dim, 4 * H), bl),
        "w_hh1": u(ks[1], (H, 4 * H), bl),
        "b1":    u(ks[2], (1, 4 * H), bl) + u(ks[3], (1, 4 * H), bl),
        "w_ih2": u(ks[4], (H, 4 * H), bl),
        "w_hh2": u(ks[5], (H, 4 * H), bl),
        "b2":    u(ks[6], (1, 4 * H), bl) + u(ks[7], (1, 4 * H), bl),
        "w_clf": u(ks[8], (H, output_dim), bl),
        "b_clf": u(ks[9], (1, output_dim), bl),
    }


def model_ref(x, params, hidden):
    """Pure-JAX reference (HIGHEST matmul precision)."""
    H = params["w_hh1"].shape[0]
    hp = lax.Precision.HIGHEST
    h0, c0 = hidden
    h0 = h0.reshape(2, H)
    c0 = c0.reshape(2, H)

    def cell(h, c, g):
        i = jax.nn.sigmoid(g[:, 0 * H:1 * H])
        f = jax.nn.sigmoid(g[:, 1 * H:2 * H])
        gg = jnp.tanh(g[:, 2 * H:3 * H])
        o = jax.nn.sigmoid(g[:, 3 * H:4 * H])
        c = f * c + i * gg
        return o * jnp.tanh(c), c

    def run_layer(inp, wih, whh, b, h, c):
        outs = []
        for t in range(inp.shape[0]):
            g = (jnp.dot(inp[t:t + 1], wih, precision=hp)
                 + jnp.dot(h, whh, precision=hp) + b)
            h, c = cell(h, c, g)
            outs.append(h)
        return jnp.concatenate(outs, axis=0), h, c

    h1, hf1, cf1 = run_layer(x, params["w_ih1"], params["w_hh1"], params["b1"],
                             h0[0:1], c0[0:1])
    h2, hf2, cf2 = run_layer(h1, params["w_ih2"], params["w_hh2"], params["b2"],
                             h0[1:2], c0[1:2])
    pred = jnp.dot(h2, params["w_clf"], precision=hp) + params["b_clf"]
    h_n = jnp.concatenate([hf1, hf2], axis=0).reshape(2, 1, H)
    c_n = jnp.concatenate([cf1, cf2], axis=0).reshape(2, 1, H)
    return pred, h2.reshape(-1, 1, H), (h_n, c_n)


if __name__ == "__main__":
    # Small shapes consistent with Model(input_dim, hidden_dim, output_dim):
    # a length-8 sequence of 16-d inputs, hidden 32 (=> 4H = 128 lanes), 8 classes.
    seq_len, input_dim, hidden_dim, output_dim = 8, 16, 32, 8

    key = jax.random.PRNGKey(0)
    kx, kp = jax.random.split(key)
    x = jax.random.normal(kx, (seq_len, input_dim), jnp.float32)
    params = init_params(kp, input_dim, hidden_dim, output_dim)

    # init_hidden(): zeros of shape (n_layer=2, 1, hidden_dim)
    hidden0 = (jnp.zeros((2, 1, hidden_dim), jnp.float32),
               jnp.zeros((2, 1, hidden_dim), jnp.float32))

    pred, lstm_out, (h_n, c_n) = model_forward(x, params, hidden0)
    jax.block_until_ready((pred, lstm_out, h_n, c_n))

    # Pure-JAX reference check.
    ref_pred, ref_out, (ref_hn, ref_cn) = model_ref(x, params, hidden0)

    assert pred.shape == (seq_len, output_dim)
    assert lstm_out.shape == (seq_len, 1, hidden_dim)
    assert h_n.shape == (2, 1, hidden_dim) and c_n.shape == (2, 1, hidden_dim)
    assert jnp.allclose(pred, ref_pred, atol=1e-3, rtol=1e-3), "pred mismatch vs reference"
    assert jnp.allclose(lstm_out, ref_out, atol=1e-3, rtol=1e-3), "lstm_out mismatch vs reference"
    assert jnp.allclose(h_n, ref_hn, atol=1e-3, rtol=1e-3), "h_n mismatch vs reference"
    assert jnp.allclose(c_n, ref_cn, atol=1e-3, rtol=1e-3), "c_n mismatch vs reference"

    print("KERNEL_OK")
</pallas_src>

<mosaic_0001>
module attributes {stable_mosaic.version = 11 : i64} {
  func.func @lstm_clf_kernel(%arg0: memref<8x16xf32, #tpu.memory_space<vmem>>, %arg1: memref<16x128xf32, #tpu.memory_space<vmem>>, %arg2: memref<32x128xf32, #tpu.memory_space<vmem>>, %arg3: memref<1x128xf32, #tpu.memory_space<vmem>>, %arg4: memref<32x128xf32, #tpu.memory_space<vmem>>, %arg5: memref<32x128xf32, #tpu.memory_space<vmem>>, %arg6: memref<1x128xf32, #tpu.memory_space<vmem>>, %arg7: memref<32x8xf32, #tpu.memory_space<vmem>>, %arg8: memref<1x8xf32, #tpu.memory_space<vmem>>, %arg9: memref<2x32xf32, #tpu.memory_space<vmem>>, %arg10: memref<2x32xf32, #tpu.memory_space<vmem>>, %arg11: memref<8x8xf32, #tpu.memory_space<vmem>>, %arg12: memref<8x32xf32, #tpu.memory_space<vmem>>, %arg13: memref<2x32xf32, #tpu.memory_space<vmem>>, %arg14: memref<2x32xf32, #tpu.memory_space<vmem>>, %arg15: memref<8x128xf32, #tpu.memory_space<vmem>>, %arg16: memref<8x32xf32, #tpu.memory_space<vmem>>) attributes {dimension_semantics = [], scalar_prefetch = 0 : i64, scratch_operands = 2 : i64, tpu.core_type = #tpu.core_type<tc>} {
    %c0 = arith.constant 0 : index
    %c0_0 = arith.constant 0 : index
    %0 = vector.load %arg0[%c0, %c0_0] : memref<8x16xf32, #tpu.memory_space<vmem>>, vector<8x16xf32>
    %c0_1 = arith.constant 0 : index
    %c0_2 = arith.constant 0 : index
    %1 = vector.load %arg1[%c0_1, %c0_2] : memref<16x128xf32, #tpu.memory_space<vmem>>, vector<16x128xf32>
    %cst = arith.constant dense<0.000000e+00> : vector<8x128xf32>
    %2 = tpu.matmul %0, %1, %cst {dimension_numbers = #tpu.dot_dimension_numbers<[1], [0], [0], [1], [0, 0, 1, 1], [], []>} : vector<8x16xf32>, vector<16x128xf32>, vector<8x128xf32> -> vector<8x128xf32>
    %c0_3 = arith.constant 0 : index
    %c0_4 = arith.constant 0 : index
    %3 = vector.load %arg3[%c0_3, %c0_4] : memref<1x128xf32, #tpu.memory_space<vmem>>, vector<1x128xf32>
    %4 = vector.broadcast %3 : vector<1x128xf32> to vector<8x128xf32>
    %5 = arith.addf %2, %4 : vector<8x128xf32>
    %c0_5 = arith.constant 0 : index
    %c0_6 = arith.constant 0 : index
    %6 = vector.load %arg15[%c0_5, %c0_6] : memref<8x128xf32, #tpu.memory_space<vmem>>, vector<8x128xf32>
    tpu.vector_store %arg15[%c0_5, %c0_6], %5 {strides = array<i32>} : memref<8x128xf32, #tpu.memory_space<vmem>>, vector<8x128xf32>,
    %c0_7 = arith.constant 0 : index
    %c0_8 = arith.constant 0 : index
    %7 = vector.load %arg9[%c0_7, %c0_8] : memref<2x32xf32, #tpu.memory_space<vmem>>, vector<1x32xf32>
    %c0_9 = arith.constant 0 : index
    %c0_10 = arith.constant 0 : index
    %8 = vector.load %arg10[%c0_9, %c0_10] : memref<2x32xf32, #tpu.memory_space<vmem>>, vector<1x32xf32>
    %c0_i32 = arith.constant 0 : i32
    %c8_i32 = arith.constant 8 : i32
    %9 = arith.addi %c0_i32, %c8_i32 : i32
    %c1_i32 = arith.constant 1 : i32
    %10:2 = scf.for %arg17 = %c0_i32 to %9 step %c1_i32 iter_args(%arg18 = %7, %arg19 = %8) -> (vector<1x32xf32>, vector<1x32xf32>)  : i32 {
      %33 = arith.index_cast %arg17 : i32 to index
      %c0_45 = arith.constant 0 : index
      %34 = vector.load %arg15[%33, %c0_45] : memref<8x128xf32, #tpu.memory_space<vmem>>, vector<1x128xf32>
      %c0_46 = arith.constant 0 : index
      %c0_47 = arith.constant 0 : index
      %35 = vector.load %arg2[%c0_46, %c0_47] : memref<32x128xf32, #tpu.memory_space<vmem>>, vector<32x128xf32>
      %cst_48 = arith.constant dense<0.000000e+00> : vector<1x128xf32>
      %36 = tpu.matmul %arg18, %35, %cst_48 {dimension_numbers = #tpu.dot_dimension_numbers<[1], [0], [0], [1], [0, 0, 1, 1], [], []>} : vector<1x32xf32>, vector<32x128xf32>, vector<1x128xf32> -> vector<1x128xf32>
      %37 = arith.addf %34, %36 : vector<1x128xf32>
      %38 = vector.extract_strided_slice %37 {offsets = [0, 0], sizes = [1, 32], strides = [1, 1]} : vector<1x128xf32> to vector<1x32xf32>
      %cst_49 = arith.constant 0.000000e+00 : f32
      %39 = vector.broadcast %cst_49 : f32 to vector<1x32xf32>
      %40 = arith.subf %39, %38 : vector<1x32xf32>
      %41 = math.exp %40 : vector<1x32xf32>
      %cst_50 = arith.constant 1.000000e+00 : f32
      %42 = vector.broadcast %cst_50 : f32 to vector<1x32xf32>
      %43 = arith.addf %42, %41 : vector<1x32xf32>
      %cst_51 = arith.constant 1.000000e+00 : f32
      %44 = vector.broadcast %cst_51 : f32 to vector<1x32xf32>
      %45 = arith.divf %44, %43 : vector<1x32xf32>
      %46 = vector.extract_strided_slice %37 {offsets = [0, 32], sizes = [1, 32], strides = [1, 1]} : vector<1x128xf32> to vector<1x32xf32>
      %cst_52 = arith.constant 0.000000e+00 : f32
      %47 = vector.broadcast %cst_52 : f32 to vector<1x32xf32>
      %48 = arith.subf %47, %46 : vector<1x32xf32>
      %49 = math.exp %48 : vector<1x32xf32>
      %cst_53 = arith.constant 1.000000e+00 : f32
      %50 = vector.broadcast %cst_53 : f32 to vector<1x32xf32>
      %51 = arith.addf %50, %49 : vector<1x32xf32>
      %cst_54 = arith.constant 1.000000e+00 : f32
      %52 = vector.broadcast %cst_54 : f32 to vector<1x32xf32>
      %53 = arith.divf %52, %51 : vector<1x32xf32>
      %54 = vector.extract_strided_slice %37 {offsets = [0, 64], sizes = [1, 32], strides = [1, 1]} : vector<1x128xf32> to vector<1x32xf32>
      %55 = math.tanh %54 : vector<1x32xf32>
      %56 = vector.extract_strided_slice %37 {offsets = [0, 96], sizes = [1, 32], strides = [1, 1]} : vector<1x128xf32> to vector<1x32xf32>
      %cst_55 = arith.constant 0.000000e+00 : f32
      %57 = vector.broadcast %cst_55 : f32 to vector<1x32xf32>
      %58 = arith.subf %57, %56 : vector<1x32xf32>
      %59 = math.exp %58 : vector<1x32xf32>
      %cst_56 = arith.constant 1.000000e+00 : f32
      %60 = vector.broadcast %cst_56 : f32 to vector<1x32xf32>
      %61 = arith.addf %60, %59 : vector<1x32xf32>
      %cst_57 = arith.constant 1.000000e+00 : f32
      %62 = vector.broadcast %cst_57 : f32 to vector<1x32xf32>
      %63 = arith.divf %62, %61 : vector<1x32xf32>
      %64 = arith.mulf %53, %arg19 : vector<1x32xf32>
      %65 = arith.mulf %45, %55 : vector<1x32xf32>
      %66 = arith.addf %64, %65 : vector<1x32xf32>
      %67 = math.tanh %66 : vector<1x32xf32>
      %68 = arith.mulf %63, %67 : vector<1x32xf32>
      %69 = arith.index_cast %arg17 : i32 to index
      %c0_58 = arith.constant 0 : index
      %70 = vector.load %arg16[%69, %c0_58] : memref<8x32xf32, #tpu.memory_space<vmem>>, vector<1x32xf32>
      tpu.vector_store %arg16[%69, %c0_58], %68 {strides = array<i32>} : memref<8x32xf32, #tpu.memory_space<vmem>>, vector<1x32xf32>,
      scf.yield %68, %66 : vector<1x32xf32>, vector<1x32xf32>
    }
    %c8_i32_11 = arith.constant 8 : i32
    %c0_12 = arith.constant 0 : index
    %c0_13 = arith.constant 0 : index
    %11 = vector.load %arg16[%c0_12, %c0_13] : memref<8x32xf32, #tpu.memory_space<vmem>>, vector<8x32xf32>
    %c0_14 = arith.constant 0 : index
    %c0_15 = arith.constant 0 : index
    %12 = vector.load %arg4[%c0_14, %c0_15] : memref<32x128xf32, #tpu.memory_space<vmem>>, vector<32x128xf32>
    %cst_16 = arith.constant dense<0.000000e+00> : vector<8x128xf32>
    %13 = tpu.matmul %11, %12, %cst_16 {dimension_numbers = #tpu.dot_dimension_numbers<[1], [0], [0], [1], [0, 0, 1, 1], [], []>} : vector<8x32xf32>, vector<32x128xf32>, vector<8x128xf32> -> vector<8x128xf32>
    %c0_17 = arith.constant 0 : index
    %c0_18 = arith.constant 0 : index
    %14 = vector.load %arg6[%c0_17, %c0_18] : memref<1x128xf32, #tpu.memory_space<vmem>>, vector<1x128xf32>
    %15 = vector.broadcast %14 : vector<1x128xf32> to vector<8x128xf32>
    %16 = arith.addf %13, %15 : vector<8x128xf32>
    %c0_19 = arith.constant 0 : index
    %c0_20 = arith.constant 0 : index
    %17 = vector.load %arg15[%c0_19, %c0_20] : memref<8x128xf32, #tpu.memory_space<vmem>>, vector<8x128xf32>
    tpu.vector_store %arg15[%c0_19, %c0_20], %16 {strides = array<i32>} : memref<8x128xf32, #tpu.memory_space<vmem>>, vector<8x128xf32>,
    %c1 = arith.constant 1 : index
    %c0_21 = arith.constant 0 : index
    %18 = vector.load %arg9[%c1, %c0_21] : memref<2x32xf32, #tpu.memory_space<vmem>>, vector<1x32xf32>
    %c1_22 = arith.constant 1 : index
    %c0_23 = arith.constant 0 : index
    %19 = vector.load %arg10[%c1_22, %c0_23] : memref<2x32xf32, #tpu.memory_space<vmem>>, vector<1x32xf32>
    %c0_i32_24 = arith.constant 0 : i32
    %c8_i32_25 = arith.constant 8 : i32
    %20 = arith.addi %c0_i32_24, %c8_i32_25 : i32
    %c1_i32_26 = arith.constant 1 : i32
    %21:2 = scf.for %arg17 = %c0_i32_24 to %20 step %c1_i32_26 iter_args(%arg18 = %18, %arg19 = %19) -> (vector<1x32xf32>, vector<1x32xf32>)  : i32 {
      %33 = arith.index_cast %arg17 : i32 to index
      %c0_45 = arith.constant 0 : index
      %34 = vector.load %arg15[%33, %c0_45] : memref<8x128xf32, #tpu.memory_space<vmem>>, vector<1x128xf32>
      %c0_46 = arith.constant 0 : index
      %c0_47 = arith.constant 0 : index
      %35 = vector.load %arg5[%c0_46, %c0_47] : memref<32x128xf32, #tpu.memory_space<vmem>>, vector<32x128xf32>
      %cst_48 = arith.constant dense<0.000000e+00> : vector<1x128xf32>
      %36 = tpu.matmul %arg18, %35, %cst_48 {dimension_numbers = #tpu.dot_dimension_numbers<[1], [0], [0], [1], [0, 0, 1, 1], [], []>} : vector<1x32xf32>, vector<32x128xf32>, vector<1x128xf32> -> vector<1x128xf32>
      %37 = arith.addf %34, %36 : vector<1x128xf32>
      %38 = vector.extract_strided_slice %37 {offsets = [0, 0], sizes = [1, 32], strides = [1, 1]} : vector<1x128xf32> to vector<1x32xf32>
      %cst_49 = arith.constant 0.000000e+00 : f32
      %39 = vector.broadcast %cst_49 : f32 to vector<1x32xf32>
      %40 = arith.subf %39, %38 : vector<1x32xf32>
      %41 = math.exp %40 : vector<1x32xf32>
      %cst_50 = arith.constant 1.000000e+00 : f32
      %42 = vector.broadcast %cst_50 : f32 to vector<1x32xf32>
      %43 = arith.addf %42, %41 : vector<1x32xf32>
      %cst_51 = arith.constant 1.000000e+00 : f32
      %44 = vector.broadcast %cst_51 : f32 to vector<1x32xf32>
      %45 = arith.divf %44, %43 : vector<1x32xf32>
      %46 = vector.extract_strided_slice %37 {offsets = [0, 32], sizes = [1, 32], strides = [1, 1]} : vector<1x128xf32> to vector<1x32xf32>
      %cst_52 = arith.constant 0.000000e+00 : f32
      %47 = vector.broadcast %cst_52 : f32 to vector<1x32xf32>
      %48 = arith.subf %47, %46 : vector<1x32xf32>
      %49 = math.exp %48 : vector<1x32xf32>
      %cst_53 = arith.constant 1.000000e+00 : f32
      %50 = vector.broadcast %cst_53 : f32 to vector<1x32xf32>
      %51 = arith.addf %50, %49 : vector<1x32xf32>
      %cst_54 = arith.constant 1.000000e+00 : f32
      %52 = vector.broadcast %cst_54 : f32 to vector<1x32xf32>
      %53 = arith.divf %52, %51 : vector<1x32xf32>
      %54 = vector.extract_strided_slice %37 {offsets = [0, 64], sizes = [1, 32], strides = [1, 1]} : vector<1x128xf32> to vector<1x32xf32>
      %55 = math.tanh %54 : vector<1x32xf32>
      %56 = vector.extract_strided_slice %37 {offsets = [0, 96], sizes = [1, 32], strides = [1, 1]} : vector<1x128xf32> to vector<1x32xf32>
      %cst_55 = arith.constant 0.000000e+00 : f32
      %57 = vector.broadcast %cst_55 : f32 to vector<1x32xf32>
      %58 = arith.subf %57, %56 : vector<1x32xf32>
      %59 = math.exp %58 : vector<1x32xf32>
      %cst_56 = arith.constant 1.000000e+00 : f32
      %60 = vector.broadcast %cst_56 : f32 to vector<1x32xf32>
      %61 = arith.addf %60, %59 : vector<1x32xf32>
      %cst_57 = arith.constant 1.000000e+00 : f32
      %62 = vector.broadcast %cst_57 : f32 to vector<1x32xf32>
      %63 = arith.divf %62, %61 : vector<1x32xf32>
      %64 = arith.mulf %53, %arg19 : vector<1x32xf32>
      %65 = arith.mulf %45, %55 : vector<1x32xf32>
      %66 = arith.addf %64, %65 : vector<1x32xf32>
      %67 = math.tanh %66 : vector<1x32xf32>
      %68 = arith.mulf %63, %67 : vector<1x32xf32>
      %69 = arith.index_cast %arg17 : i32 to index
      %c0_58 = arith.constant 0 : index
      %70 = vector.load %arg12[%69, %c0_58] : memref<8x32xf32, #tpu.memory_space<vmem>>, vector<1x32xf32>
      tpu.vector_store %arg12[%69, %c0_58], %68 {strides = array<i32>} : memref<8x32xf32, #tpu.memory_space<vmem>>, vector<1x32xf32>,
      scf.yield %68, %66 : vector<1x32xf32>, vector<1x32xf32>
    }
    %c8_i32_27 = arith.constant 8 : i32
    %c0_28 = arith.constant 0 : index
    %c0_29 = arith.constant 0 : index
    %22 = vector.load %arg13[%c0_28, %c0_29] : memref<2x32xf32, #tpu.memory_space<vmem>>, vector<1x32xf32>
    tpu.vector_store %arg13[%c0_28, %c0_29], %10#0 {strides = array<i32>} : memref<2x32xf32, #tpu.memory_space<vmem>>, vector<1x32xf32>,
    %c1_30 = arith.constant 1 : index
    %c0_31 = arith.constant 0 : index
    %23 = vector.load %arg13[%c1_30, %c0_31] : memref<2x32xf32, #tpu.memory_space<vmem>>, vector<1x32xf32>
    tpu.vector_store %arg13[%c1_30, %c0_31], %21#0 {strides = array<i32>} : memref<2x32xf32, #tpu.memory_space<vmem>>, vector<1x32xf32>,
    %c0_32 = arith.constant 0 : index
    %c0_33 = arith.constant 0 : index
    %24 = vector.load %arg14[%c0_32, %c0_33] : memref<2x32xf32, #tpu.memory_space<vmem>>, vector<1x32xf32>
    tpu.vector_store %arg14[%c0_32, %c0_33], %10#1 {strides = array<i32>} : memref<2x32xf32, #tpu.memory_space<vmem>>, vector<1x32xf32>,
    %c1_34 = arith.constant 1 : index
    %c0_35 = arith.constant 0 : index
    %25 = vector.load %arg14[%c1_34, %c0_35] : memref<2x32xf32, #tpu.memory_space<vmem>>, vector<1x32xf32>
    tpu.vector_store %arg14[%c1_34, %c0_35], %21#1 {strides = array<i32>} : memref<2x32xf32, #tpu.memory_space<vmem>>, vector<1x32xf32>,
    %c0_36 = arith.constant 0 : index
    %c0_37 = arith.constant 0 : index
    %26 = vector.load %arg12[%c0_36, %c0_37] : memref<8x32xf32, #tpu.memory_space<vmem>>, vector<8x32xf32>
    %c0_38 = arith.constant 0 : index
    %c0_39 = arith.constant 0 : index
    %27 = vector.load %arg7[%c0_38, %c0_39] : memref<32x8xf32, #tpu.memory_space<vmem>>, vector<32x8xf32>
    %cst_40 = arith.constant dense<0.000000e+00> : vector<8x8xf32>
    %28 = tpu.matmul %26, %27, %cst_40 {dimension_numbers = #tpu.dot_dimension_numbers<[1], [0], [0], [1], [0, 0, 1, 1], [], []>} : vector<8x32xf32>, vector<32x8xf32>, vector<8x8xf32> -> vector<8x8xf32>
    %c0_41 = arith.constant 0 : index
    %c0_42 = arith.constant 0 : index
    %29 = vector.load %arg8[%c0_41, %c0_42] : memref<1x8xf32, #tpu.memory_space<vmem>>, vector<1x8xf32>
    %30 = vector.broadcast %29 : vector<1x8xf32> to vector<8x8xf32>
    %31 = arith.addf %28, %30 : vector<8x8xf32>
    %c0_43 = arith.constant 0 : index
    %c0_44 = arith.constant 0 : index
    %32 = vector.load %arg11[%c0_43, %c0_44] : memref<8x8xf32, #tpu.memory_space<vmem>>, vector<8x8xf32>
    tpu.vector_store %arg11[%c0_43, %c0_44], %31 {strides = array<i32>} : memref<8x8xf32, #tpu.memory_space<vmem>>, vector<8x8xf32>,
    return
  }
}

</mosaic_0001>

<llo_original>
// kernel: tpu_custom_call.1
$region0: #{tpu_custom_call.1}
  #allocation0 [shape = 'u32[]', space=smem, size = 0x4, offset = 0x4, fixed_abs, tag = 'smem constant byte address 0x4 - core index']
  #allocation1 [shape = 'u32[144,128]{1,0:T(1,128)}', space=vmem, size = 0x12000, scoped, tag = 'internal scratch']
  #allocation2 [shape = 'f32[8,128]{1,0:T(8,128)}', space=vmem, size = 0x1000, scoped, tag = 'scratch operand']
  #allocation3 [shape = 'f32[8,32]{1,0:T(8,128)}', space=vmem, size = 0x1000, scoped, tag = 'scratch operand']
  %s0 = inlined_call_operand.vmem [shape: f32[8,16], index: 0, kind: input, shape index: {}]
  %s1 = inlined_call_operand.hbm [shape: f32[16,128], index: 1, kind: input, shape index: {}]
  %s2 = inlined_call_operand.vmem [shape: f32[32,128], index: 2, kind: input, shape index: {}]
  %s3 = inlined_call_operand.vmem [shape: f32[1,128], index: 3, kind: input, shape index: {}]
  %s4 = inlined_call_operand.hbm [shape: f32[32,128], index: 4, kind: input, shape index: {}]
  %s5 = inlined_call_operand.hbm [shape: f32[32,128], index: 5, kind: input, shape index: {}]
  %s6 = inlined_call_operand.vmem [shape: f32[1,128], index: 6, kind: input, shape index: {}]
  %s7 = inlined_call_operand.vmem [shape: f32[32,8], index: 7, kind: input, shape index: {}]
  %s8 = inlined_call_operand.vmem [shape: f32[1,8], index: 8, kind: input, shape index: {}]
  %s9 = inlined_call_operand.vmem [shape: f32[2,32], index: 9, kind: input, shape index: {}]
  %s10 = inlined_call_operand.vmem [shape: f32[2,32], index: 10, kind: input, shape index: {}]
  %s11 = inlined_call_operand.hbm [shape: f32[8,8], index: 11, kind: output, shape index: {0}]
  %s12 = inlined_call_operand.hbm [shape: f32[8,32], index: 12, kind: output, shape index: {1}]
  %s13 = inlined_call_operand.hbm [shape: f32[2,32], index: 13, kind: output, shape index: {2}]
  %s14 = inlined_call_operand.hbm [shape: f32[2,32], index: 14, kind: output, shape index: {3}]
  %15 = xla_tuple %s11, %s12, %s13, %s14
  %s16 = sld [smem:[#allocation0]]
  $region104: #{tpu_custom_call.1} parent=0
    _
  %s18 = ssub.s32 1, %s16
  %s19 = scalar_select 0, %s18, %s16
  $region1: #{tpu_custom_call.1} parent=0
    #allocation4 [shape = 'u8[8192]{0}', space=vmem, size = 0x2000, scoped, tag = 'input window, operand 1, single buffered']
    #allocation5 [shape = 's32[1]{0}', space=sflag, size = 0x4, scoped, tag = 'scoped memory for tpu_custom_call.1']
    #allocation6 [shape = 's32[1]{0}', space=sflag, size = 0x4, scoped, tag = 'scoped memory for tpu_custom_call.1']
    #allocation7 [shape = 'u8[16384]{0}', space=vmem, size = 0x4000, scoped, tag = 'input window, operand 4, single buffered']
    #allocation8 [shape = 's32[1]{0}', space=sflag, size = 0x4, scoped, tag = 'scoped memory for tpu_custom_call.1']
    #allocation9 [shape = 'u8[16384]{0}', space=vmem, size = 0x4000, scoped, tag = 'input window, operand 5, single buffered']
    #allocation10 [shape = 'u8[4096]{0}', space=vmem, size = 0x1000, scoped, tag = 'output window, operand 0, single buffered']
    #allocation11 [shape = 'u8[4096]{0}', space=vmem, size = 0x1000, scoped, tag = 'output window, operand 1, single buffered']
    #allocation12 [shape = 's32[1]{0}', space=sflag, size = 0x4, scoped, tag = 'scoped memory for tpu_custom_call.1']
    #allocation13 [shape = 'u8[1024]{0}', space=vmem, size = 0x400, scoped, tag = 'output window, operand 2, single buffered']
    #allocation14 [shape = 'u8[1024]{0}', space=vmem, size = 0x400, scoped, tag = 'output window, operand 3, single buffered']
    #allocation15 [shape = 's32[1]{0}', space=sflag, size = 0x4, scoped, tag = 'scoped memory for tpu_custom_call.1']
    %20 = vsyncpa [#allocation5], 0
    %21 = vsyncpa [#allocation8], 0
    %22 = vsyncpa [#allocation6], 0
    %23 = vsyncpa [#allocation12], 0
    %24 = vsyncpa [#allocation15], 0
    // Predicated region
    $region2: #{tpu_custom_call.1} parent=1 // pred_check
      _
    $region3: #{tpu_custom_call.1} parent=1 // pred_check_branch
      %26 = sbr.rel (0) target = $region5
    $region4: #{tpu_custom_call.1} parent=1 // pred_region
      _
    $region5: #{tpu_custom_call.1} parent=1 // pred_fallthru
      _
    // Predicated region
    $region6: #{tpu_custom_call.1} parent=1 // pred_check
      _
    $region7: #{tpu_custom_call.1} parent=1 // pred_check_branch
      %28 = sbr.rel (0) target = $region9
    $region8: #{tpu_custom_call.1} parent=1 // pred_region
      %s30 = ssub.s32 256, 256
      %31 = vsyncadd [#allocation5], %s30
      %s32 = sshll.u32 [#allocation4], 4
      %s33 = int_to_ptr.vmem [resolvable:$true] %s32
      %38 = dma.hbm_to_vmem [thread:$0]  %s1, 256, %s33, [#allocation5], 128, 128, 8
    $region9: #{tpu_custom_call.1} parent=1 // pred_fallthru
      _
    // Predicated region
    $region10: #{tpu_custom_call.1} parent=1 // pred_check
      _
    $region11: #{tpu_custom_call.1} parent=1 // pred_check_branch
      %40 = sbr.rel (0) target = $region13
    $region12: #{tpu_custom_call.1} parent=1 // pred_region
      _
    $region13: #{tpu_custom_call.1} parent=1 // pred_fallthru
      _
    // Predicated region
    $region14: #{tpu_custom_call.1} parent=1 // pred_check
      _
    $region15: #{tpu_custom_call.1} parent=1 // pred_check_branch
      %42 = sbr.rel (0) target = $region17
    $region16: #{tpu_custom_call.1} parent=1 // pred_region
      _
    $region17: #{tpu_custom_call.1} parent=1 // pred_fallthru
      _
    // Predicated region
    $region18: #{tpu_custom_call.1} parent=1 // pred_check
      _
    $region19: #{tpu_custom_call.1} parent=1 // pred_check_branch
      %44 = sbr.rel (0) target = $region21
    $region20: #{tpu_custom_call.1} parent=1 // pred_region
      %s46 = ssub.s32 512, 512
      %47 = vsyncadd [#allocation8], %s46
      %s48 = sshll.u32 [#allocation7], 4
      %s49 = int_to_ptr.vmem [resolvable:$true] %s48
      %54 = dma.hbm_to_vmem [thread:$0]  %s4, 512, %s49, [#allocation8], 128, 128, 8
    $region21: #{tpu_custom_call.1} parent=1 // pred_fallthru
      _
    // Predicated region
    $region22: #{tpu_custom_call.1} parent=1 // pred_check
      _
    $region23: #{tpu_custom_call.1} parent=1 // pred_check_branch
      %56 = sbr.rel (0) target = $region25
    $region24: #{tpu_custom_call.1} parent=1 // pred_region
      %s58 = ssub.s32 512, 512
      %59 = vsyncadd [#allocation8], %s58
      %s60 = sshll.u32 [#allocation9], 4
      %s61 = int_to_ptr.vmem [resolvable:$true] %s60
      %66 = dma.hbm_to_vmem [thread:$0]  %s5, 512, %s61, [#allocation8], 128, 128, 8
    $region25: #{tpu_custom_call.1} parent=1 // pred_fallthru
      _
    // Predicated region
    $region26: #{tpu_custom_call.1} parent=1 // pred_check
      _
    $region27: #{tpu_custom_call.1} parent=1 // pred_check_branch
      %68 = sbr.rel (0) target = $region29
    $region28: #{tpu_custom_call.1} parent=1 // pred_region
      _
    $region29: #{tpu_custom_call.1} parent=1 // pred_fallthru
      _
    // Predicated region
    $region30: #{tpu_custom_call.1} parent=1 // pred_check
      _
    $region31: #{tpu_custom_call.1} parent=1 // pred_check_branch
      %70 = sbr.rel (0) target = $region33
    $region32: #{tpu_custom_call.1} parent=1 // pred_region
      _
    $region33: #{tpu_custom_call.1} parent=1 // pred_fallthru
      _
    // Predicated region
    $region34: #{tpu_custom_call.1} parent=1 // pred_check
      _
    $region35: #{tpu_custom_call.1} parent=1 // pred_check_branch
      %72 = sbr.rel (0) target = $region37
    $region36: #{tpu_custom_call.1} parent=1 // pred_region
      _
    $region37: #{tpu_custom_call.1} parent=1 // pred_fallthru
      _
    // Predicated region
    $region38: #{tpu_custom_call.1} parent=1 // pred_check
      _
    $region39: #{tpu_custom_call.1} parent=1 // pred_check_branch
      %74 = sbr.rel (0) target = $region41
    $region40: #{tpu_custom_call.1} parent=1 // pred_region
      _
    $region41: #{tpu_custom_call.1} parent=1 // pred_fallthru
      _
    // Predicated region
    $region42: #{tpu_custom_call.1} parent=1 // pred_check
      _
    $region43: #{tpu_custom_call.1} parent=1 // pred_check_branch
      %76 = sbr.rel (0) target = $region45
    $region44: #{tpu_custom_call.1} parent=1 // pred_region
      _
    $region45: #{tpu_custom_call.1} parent=1 // pred_fallthru
      _
    // Predicated region
    $region46: #{tpu_custom_call.1} parent=1 // pred_check
      _
    $region47: #{tpu_custom_call.1} parent=1 // pred_check_branch
      %78 = sbr.rel (0) target = $region49
    $region48: #{tpu_custom_call.1} parent=1 // pred_region
      %79 = dma.done [#allocation5], 256
    $region49: #{tpu_custom_call.1} parent=1 // pred_fallthru
      _
    // Predicated region
    $region50: #{tpu_custom_call.1} parent=1 // pred_check
      _
    $region51: #{tpu_custom_call.1} parent=1 // pred_check_branch
      %81 = sbr.rel (0) target = $region53
    $region52: #{tpu_custom_call.1} parent=1 // pred_region
      %82 = dma.done [#allocation8], 512
    $region53: #{tpu_custom_call.1} parent=1 // pred_fallthru
      _
    // Predicated region
    $region54: #{tpu_custom_call.1} parent=1 // pred_check
      _
    $region55: #{tpu_custom_call.1} parent=1 // pred_check_branch
      %84 = sbr.rel (0) target = $region57
    $region56: #{tpu_custom_call.1} parent=1 // pred_region
      %85 = dma.done [#allocation8], 512
    $region57: #{tpu_custom_call.1} parent=1 // pred_fallthru
      _
    %v86 = vld [vmem:[%s0] sm:$0xff]
    %v87 = vld [vmem:[#allocation4] sm:$0xff]
    %v88 = vld [vmem:[#allocation4 + $0x8] sm:$0xff]
    %v89 = vld [vmem:[%s3] sm:$0x1]
    %v91 = vlaneseq
    %v92 = vshrl.u32 %v91, 7
    %v93 = vsub.s32 0, %v92
    %v94 = vrot.slane %v89, %v93
    %vm96 = vcmask 130048
    %v98 = vsel %vm96, %v86, 0
    %100 = vmatprep.subr.mxu0 0.0
    %101 = vmatpush1.msra.mxu0 %v87
    %102 = vmatprep.subr.mxu0 0.0
    %103 = vmatpush1.msra.mxu0 %v88
    %104 = vmatprep.subr.mxu0 0.0
    %105 = vmatpush1.msra.mxu0 0.0
    %106 = vmatprep.subr.mxu0 0.0
    %107 = vmatpush1.msra.mxu0 0.0
    %108 = vmatprep.subr.mxu0 0.0
    %109 = vmatpush1.msra.mxu0 0.0
    %110 = vmatprep.subr.mxu0 0.0
    %111 = vmatpush1.msra.mxu0 0.0
    %112 = vmatprep.subr.mxu0 0.0
    %113 = vmatpush1.msra.mxu0 0.0
    %114 = vmatprep.subr.mxu0 0.0
    %115 = vmatpush1.msra.mxu0 0.0
    %116 = vmatprep.subr.mxu0 0.0
    %117 = vmatpush1.msra.mxu0 0.0
    %118 = vmatprep.subr.mxu0 0.0
    %119 = vmatpush1.msra.mxu0 0.0
    %120 = vmatprep.subr.mxu0 0.0
    %121 = vmatpush1.msra.mxu0 0.0
    %122 = vmatprep.subr.mxu0 0.0
    %123 = vmatpush1.msra.mxu0 0.0
    %124 = vmatprep.subr.mxu0 0.0
    %125 = vmatpush1.msra.mxu0 0.0
    %126 = vmatprep.subr.mxu0 0.0
    %127 = vmatpush1.msra.mxu0 0.0
    %128 = vmatprep.subr.mxu0 0.0
    %129 = vmatpush1.msra.mxu0 0.0
    %130 = vmatprep.subr.mxu0 0.0
    %131 = vmatpush1.msra.mxu0 0.0
    %132 = vmatprep.subr.mxu0 0.0
    %133 = vmatpush1.msra.mxu0 0.0
    %134 = vmatprep.subr.mxu0 0.0
    %135 = vmatpush1.msra.mxu0 0.0
    %136 = vmatprep.subr.mxu0 0.0
    %137 = vmatpush1.msra.mxu0 0.0
    %138 = vmatprep.subr.mxu0 0.0
    %139 = vmatpush1.msra.mxu0 0.0
    %140 = vmatprep.subr.mxu0 0.0
    %141 = vmatpush1.msra.mxu0 0.0
    %142 = vmatprep.subr.mxu0 0.0
    %143 = vmatpush1.msra.mxu0 0.0
    %144 = vmatprep.subr.mxu0 0.0
    %145 = vmatpush1.msra.mxu0 0.0
    %146 = vmatprep.subr.mxu0 0.0
    %147 = vmatpush1.msra.mxu0 0.0
    %148 = vmatprep.subr.mxu0 0.0
    %149 = vmatpush1.msra.mxu0 0.0
    %150 = vmatprep.subr.mxu0 0.0
    %151 = vmatpush1.msra.mxu0 0.0
    %152 = vmatprep.subr.mxu0 0.0
    %153 = vmatpush1.msra.mxu0 0.0
    %154 = vmatprep.subr.mxu0 0.0
    %155 = vmatpush1.msra.mxu0 0.0
    %156 = vmatprep.subr.mxu0 0.0
    %157 = vmatpush1.msra.mxu0 0.0
    %158 = vmatprep.subr.mxu0 0.0
    %159 = vmatpush1.msra.mxu0 0.0
    %160 = vmatprep.subr.mxu0 0.0
    %161 = vmatpush1.msra.mxu0 0.0
    %162 = vmatprep.subr.mxu0 0.0
    %163 = vmatpush1.msra.mxu0 0.0
    %164 = vmatprep.mubr.f32.mxu0 0.0
    %165 = vmatmul.mubr.f32.gmra.mrb[0].mxu0 %v98
    %v166 = vpop.f32.mrb[0].mxu0
    %v167 = vadd.f32 %v94, %v166
    %v168 = vpop.f32.mrb[0].mxu0
    %169 = vdwg.mxu0
    %170 = vst [vmem:[#allocation2] sm:$0xff] %v167
    %v171 = vld [vmem:[%s9] sm:$0x1]
    %v172 = vld [vmem:[%s10] sm:$0x1]
    loop: start=0, step=1, limit=8
    $region58: #{tpu_custom_call.1} parent=1 // loop_pre_header
      _
    $region59: #{tpu_custom_call.1} parent=1 // loop_header
      %s174 = sphi 0, %s178
      %p175 = scmp.ge.s32.totalorder %s174, 8
      %v179 = vphi %v171, %v292
      %v180 = vphi %v172, %v299
    $region60: #{tpu_custom_call.1} parent=1 // loop_header_branch
      %177 = sbr.rel (%p175) target = $region64
    $region61: #{tpu_custom_call.1} parent=1 // loop_body
      %s181 = scalar_lea.vmem [#allocation2], %s174
      %v182 = vld [vmem:[%s181] sm:$0x1]
      %v183 = vld [vmem:[%s2] sm:$0xff]
      %v184 = vld [vmem:[%s2 + $0x8] sm:$0xff]
      %v185 = vld [vmem:[%s2 + $0x10] sm:$0xff]
      %v186 = vld [vmem:[%s2 + $0x18] sm:$0xff]
      %vm187 = vcmask 261120
      %v189 = vsel %vm187, %v179, 0
      %191 = vmatprep.subr.mxu0 0.0
      %192 = vmatpush1.msra.mxu0 %v183
      %193 = vmatprep.subr.mxu0 0.0
      %194 = vmatpush1.msra.mxu0 %v184
      %195 = vmatprep.subr.mxu0 0.0
      %196 = vmatpush1.msra.mxu0 %v185
      %197 = vmatprep.subr.mxu0 0.0
      %198 = vmatpush1.msra.mxu0 %v186
      %199 = vmatprep.subr.mxu0 0.0
      %200 = vmatpush1.msra.mxu0 0.0
      %201 = vmatprep.subr.mxu0 0.0
      %202 = vmatpush1.msra.mxu0 0.0
      %203 = vmatprep.subr.mxu0 0.0
      %204 = vmatpush1.msra.mxu0 0.0
      %205 = vmatprep.subr.mxu0 0.0
      %206 = vmatpush1.msra.mxu0 0.0
      %207 = vmatprep.subr.mxu0 0.0
      %208 = vmatpush1.msra.mxu0 0.0
      %209 = vmatprep.subr.mxu0 0.0
      %210 = vmatpush1.msra.mxu0 0.0
      %211 = vmatprep.subr.mxu0 0.0
      %212 = vmatpush1.msra.mxu0 0.0
      %213 = vmatprep.subr.mxu0 0.0
      %214 = vmatpush1.msra.mxu0 0.0
      %215 = vmatprep.subr.mxu0 0.0
      %216 = vmatpush1.msra.mxu0 0.0
      %217 = vmatprep.subr.mxu0 0.0
      %218 = vmatpush1.msra.mxu0 0.0
      %219 = vmatprep.subr.mxu0 0.0
      %220 = vmatpush1.msra.mxu0 0.0
      %221 = vmatprep.subr.mxu0 0.0
      %222 = vmatpush1.msra.mxu0 0.0
      %223 = vmatprep.subr.mxu0 0.0
      %224 = vmatpush1.msra.mxu0 0.0
      %225 = vmatprep.subr.mxu0 0.0
      %226 = vmatpush1.msra.mxu0 0.0
      %227 = vmatprep.subr.mxu0 0.0
      %228 = vmatpush1.msra.mxu0 0.0
      %229 = vmatprep.subr.mxu0 0.0
      %230 = vmatpush1.msra.mxu0 0.0
      %231 = vmatprep.subr.mxu0 0.0
      %232 = vmatpush1.msra.mxu0 0.0
      %233 = vmatprep.subr.mxu0 0.0
      %234 = vmatpush1.msra.mxu0 0.0
      %235 = vmatprep.subr.mxu0 0.0
      %236 = vmatpush1.msra.mxu0 0.0
      %237 = vmatprep.subr.mxu0 0.0
      %238 = vmatpush1.msra.mxu0 0.0
      %239 = vmatprep.subr.mxu0 0.0
      %240 = vmatpush1.msra.mxu0 0.0
      %241 = vmatprep.subr.mxu0 0.0
      %242 = vmatpush1.msra.mxu0 0.0
      %243 = vmatprep.subr.mxu0 0.0
      %244 = vmatpush1.msra.mxu0 0.0
      %245 = vmatprep.subr.mxu0 0.0
      %246 = vmatpush1.msra.mxu0 0.0
      %247 = vmatprep.subr.mxu0 0.0
      %248 = vmatpush1.msra.mxu0 0.0
      %249 = vmatprep.subr.mxu0 0.0
      %250 = vmatpush1.msra.mxu0 0.0
      %251 = vmatprep.subr.mxu0 0.0
      %252 = vmatpush1.msra.mxu0 0.0
      %253 = vmatprep.subr.mxu0 0.0
      %254 = vmatpush1.msra.mxu0 0.0
      %255 = vmatprep.mubr.f32.mxu0 0.0
      %256 = vmatmul.mubr.f32.gmra.mrb[0].mxu0 %v189
      %v257 = vpop.f32.mrb[0].mxu0
      %v258 = vadd.f32 0.0, %v257
      %v259 = vpop.f32.mrb[0].mxu0
      %260 = vdwg.mxu0
      %v261 = vadd.f32 %v182, %v258
      %v262 = vsub.f32 0.0, %v261
      %v263 = vmul.f32 %v262, 1.442695
      %v264 = vpow.pop %v263
      %v265 = vadd.f32 %v264, 1.0
      %v266 = vrcp.pop %v265
      %v267 = vmul.f32 1.0, %v266
      %v268 = vtanh.pop %v261
      %270 = vrot.lane.b32.xlu0 %v180, 32
      %v271 = vpop.permute.xlu0 %270
      %v273 = vmul.f32 %v267, %v271
      %275 = vrot.lane.b32.xlu0 %v268, 64
      %v276 = vpop.permute.xlu0 %275
      %v278 = vmul.f32 %v267, %v276
      %280 = vrot.lane.b32.xlu0 %v278, 32
      %v281 = vpop.permute.xlu0 %280
      %v283 = vadd.f32 %v273, %v281
      %v284 = vtanh.pop %v283
      %286 = vrot.lane.b32.xlu0 %v284, 64
      %v287 = vpop.permute.xlu0 %286
      %v289 = vmul.f32 %v267, %v287
      %291 = vrot.lane.b32.xlu0 %v289, 32
      %v292 = vpop.permute.xlu0 %291
      %s294 = scalar_lea.vmem [#allocation3], %s174
      %vm295 = vcmask 253952
      %296 = vst.msk [vmem:[%s294] sm:$0x1] %vm295, %v292
      %298 = vrot.lane.b32.xlu0 %v283, 96
      %v299 = vpop.permute.xlu0 %298
    $region62: #{tpu_custom_call.1} parent=1 // loop_footer
      %s178 = sadd.s32 1, %s174
    $region63: #{tpu_custom_call.1} parent=1 // loop_footer_branch
      %173 = sbr.rel target = $region59
    $region64: #{tpu_custom_call.1} parent=1 // loop_exit
      _
    %v301 = vld [vmem:[#allocation3] sm:$0xff]
    %v302 = vld [vmem:[#allocation7] sm:$0xff]
    %v303 = vld [vmem:[#allocation7 + $0x8] sm:$0xff]
    %v304 = vld [vmem:[#allocation7 + $0x10] sm:$0xff]
    %v305 = vld [vmem:[#allocation7 + $0x18] sm:$0xff]
    %v306 = vld [vmem:[%s6] sm:$0x1]
    %v308 = vlaneseq
    %v309 = vshrl.u32 %v308, 7
    %v310 = vsub.s32 0, %v309
    %v311 = vrot.slane %v306, %v310
    %vm313 = vcmask 261120
    %v315 = vsel %vm313, %v301, 0
    %317 = vmatprep.subr.mxu0 0.0
    %318 = vmatpush1.msra.mxu0 %v302
    %319 = vmatprep.subr.mxu0 0.0
    %320 = vmatpush1.msra.mxu0 %v303
    %321 = vmatprep.subr.mxu0 0.0
    %322 = vmatpush1.msra.mxu0 %v304
    %323 = vmatprep.subr.mxu0 0.0
    %324 = vmatpush1.msra.mxu0 %v305
    %325 = vmatprep.subr.mxu0 0.0
    %326 = vmatpush1.msra.mxu0 0.0
    %327 = vmatprep.subr.mxu0 0.0
    %328 = vmatpush1.msra.mxu0 0.0
    %329 = vmatprep.subr.mxu0 0.0
    %330 = vmatpush1.msra.mxu0 0.0
    %331 = vmatprep.subr.mxu0 0.0
    %332 = vmatpush1.msra.mxu0 0.0
    %333 = vmatprep.subr.mxu0 0.0
    %334 = vmatpush1.msra.mxu0 0.0
    %335 = vmatprep.subr.mxu0 0.0
    %336 = vmatpush1.msra.mxu0 0.0
    %337 = vmatprep.subr.mxu0 0.0
    %338 = vmatpush1.msra.mxu0 0.0
    %339 = vmatprep.subr.mxu0 0.0
    %340 = vmatpush1.msra.mxu0 0.0
    %341 = vmatprep.subr.mxu0 0.0
    %342 = vmatpush1.msra.mxu0 0.0
    %343 = vmatprep.subr.mxu0 0.0
    %344 = vmatpush1.msra.mxu0 0.0
    %345 = vmatprep.subr.mxu0 0.0
    %346 = vmatpush1.msra.mxu0 0.0
    %347 = vmatprep.subr.mxu0 0.0
    %348 = vmatpush1.msra.mxu0 0.0
    %349 = vmatprep.subr.mxu0 0.0
    %350 = vmatpush1.msra.mxu0 0.0
    %351 = vmatprep.subr.mxu0 0.0
    %352 = vmatpush1.msra.mxu0 0.0
    %353 = vmatprep.subr.mxu0 0.0
    %354 = vmatpush1.msra.mxu0 0.0
    %355 = vmatprep.subr.mxu0 0.0
    %356 = vmatpush1.msra.mxu0 0.0
    %357 = vmatprep.subr.mxu0 0.0
    %358 = vmatpush1.msra.mxu0 0.0
    %359 = vmatprep.subr.mxu0 0.0
    %360 = vmatpush1.msra.mxu0 0.0
    %361 = vmatprep.subr.mxu0 0.0
    %362 = vmatpush1.msra.mxu0 0.0
    %363 = vmatprep.subr.mxu0 0.0
    %364 = vmatpush1.msra.mxu0 0.0
    %365 = vmatprep.subr.mxu0 0.0
    %366 = vmatpush1.msra.mxu0 0.0
    %367 = vmatprep.subr.mxu0 0.0
    %368 = vmatpush1.msra.mxu0 0.0
    %369 = vmatprep.subr.mxu0 0.0
    %370 = vmatpush1.msra.mxu0 0.0
    %371 = vmatprep.subr.mxu0 0.0
    %372 = vmatpush1.msra.mxu0 0.0
    %373 = vmatprep.subr.mxu0 0.0
    %374 = vmatpush1.msra.mxu0 0.0
    %375 = vmatprep.subr.mxu0 0.0
    %376 = vmatpush1.msra.mxu0 0.0
    %377 = vmatprep.subr.mxu0 0.0
    %378 = vmatpush1.msra.mxu0 0.0
    %379 = vmatprep.subr.mxu0 0.0
    %380 = vmatpush1.msra.mxu0 0.0
    %381 = vmatprep.mubr.f32.mxu0 0.0
    %382 = vmatmul.mubr.f32.gmra.mrb[0].mxu0 %v315
    %v383 = vpop.f32.mrb[0].mxu0
    %v384 = vadd.f32 %v311, %v383
    %v385 = vpop.f32.mrb[0].mxu0
    %386 = vdwg.mxu0
    %387 = vst [vmem:[#allocation2] sm:$0xff] %v384
    %v388 = vld [vmem:[%s9 + $0x1] sm:$0x1]
    %v389 = vld [vmem:[%s10 + $0x1] sm:$0x1]
    loop: start=0, step=1, limit=8
    $region65: #{tpu_custom_call.1} parent=1 // loop_pre_header
      _
    $region66: #{tpu_custom_call.1} parent=1 // loop_header
      %s391 = sphi 0, %s395
      %p392 = scmp.ge.s32.totalorder %s391, 8
      %v396 = vphi %v388, %v508
      %v397 = vphi %v389, %v515
    $region67: #{tpu_custom_call.1} parent=1 // loop_header_branch
      %394 = sbr.rel (%p392) target = $region71
    $region68: #{tpu_custom_call.1} parent=1 // loop_body
      %s398 = scalar_lea.vmem [#allocation2], %s391
      %v399 = vld [vmem:[%s398] sm:$0x1]
      %v400 = vld [vmem:[#allocation9] sm:$0xff]
      %v401 = vld [vmem:[#allocation9 + $0x8] sm:$0xff]
      %v402 = vld [vmem:[#allocation9 + $0x10] sm:$0xff]
      %v403 = vld [vmem:[#allocation9 + $0x18] sm:$0xff]
      %v405 = vsel %vm313, %v396, 0
      %407 = vmatprep.subr.mxu0 0.0
      %408 = vmatpush1.msra.mxu0 %v400
      %409 = vmatprep.subr.mxu0 0.0
      %410 = vmatpush1.msra.mxu0 %v401
      %411 = vmatprep.subr.mxu0 0.0
      %412 = vmatpush1.msra.mxu0 %v402
      %413 = vmatprep.subr.mxu0 0.0
      %414 = vmatpush1.msra.mxu0 %v403
      %415 = vmatprep.subr.mxu0 0.0
      %416 = vmatpush1.msra.mxu0 0.0
      %417 = vmatprep.subr.mxu0 0.0
      %418 = vmatpush1.msra.mxu0 0.0
      %419 = vmatprep.subr.mxu0 0.0
      %420 = vmatpush1.msra.mxu0 0.0
      %421 = vmatprep.subr.mxu0 0.0
      %422 = vmatpush1.msra.mxu0 0.0
      %423 = vmatprep.subr.mxu0 0.0
      %424 = vmatpush1.msra.mxu0 0.0
      %425 = vmatprep.subr.mxu0 0.0
      %426 = vmatpush1.msra.mxu0 0.0
      %427 = vmatprep.subr.mxu0 0.0
      %428 = vmatpush1.msra.mxu0 0.0
      %429 = vmatprep.subr.mxu0 0.0
      %430 = vmatpush1.msra.mxu0 0.0
      %431 = vmatprep.subr.mxu0 0.0
      %432 = vmatpush1.msra.mxu0 0.0
      %433 = vmatprep.subr.mxu0 0.0
      %434 = vmatpush1.msra.mxu0 0.0
      %435 = vmatprep.subr.mxu0 0.0
      %436 = vmatpush1.msra.mxu0 0.0
      %437 = vmatprep.subr.mxu0 0.0
      %438 = vmatpush1.msra.mxu0 0.0
      %439 = vmatprep.subr.mxu0 0.0
      %440 = vmatpush1.msra.mxu0 0.0
      %441 = vmatprep.subr.mxu0 0.0
      %442 = vmatpush1.msra.mxu0 0.0
      %443 = vmatprep.subr.mxu0 0.0
      %444 = vmatpush1.msra.mxu0 0.0
      %445 = vmatprep.subr.mxu0 0.0
      %446 = vmatpush1.msra.mxu0 0.0
      %447 = vmatprep.subr.mxu0 0.0
      %448 = vmatpush1.msra.mxu0 0.0
      %449 = vmatprep.subr.mxu0 0.0
      %450 = vmatpush1.msra.mxu0 0.0
      %451 = vmatprep.subr.mxu0 0.0
      %452 = vmatpush1.msra.mxu0 0.0
      %453 = vmatprep.subr.mxu0 0.0
      %454 = vmatpush1.msra.mxu0 0.0
      %455 = vmatprep.subr.mxu0 0.0
      %456 = vmatpush1.msra.mxu0 0.0
      %457 = vmatprep.subr.mxu0 0.0
      %458 = vmatpush1.msra.mxu0 0.0
      %459 = vmatprep.subr.mxu0 0.0
      %460 = vmatpush1.msra.mxu0 0.0
      %461 = vmatprep.subr.mxu0 0.0
      %462 = vmatpush1.msra.mxu0 0.0
      %463 = vmatprep.subr.mxu0 0.0
      %464 = vmatpush1.msra.mxu0 0.0
      %465 = vmatprep.subr.mxu0 0.0
      %466 = vmatpush1.msra.mxu0 0.0
      %467 = vmatprep.subr.mxu0 0.0
      %468 = vmatpush1.msra.mxu0 0.0
      %469 = vmatprep.subr.mxu0 0.0
      %470 = vmatpush1.msra.mxu0 0.0
      %471 = vmatprep.mubr.f32.mxu0 0.0
      %472 = vmatmul.mubr.f32.gmra.mrb[0].mxu0 %v405
      %v473 = vpop.f32.mrb[0].mxu0
      %v474 = vadd.f32 0.0, %v473
      %v475 = vpop.f32.mrb[0].mxu0
      %476 = vdwg.mxu0
      %v477 = vadd.f32 %v399, %v474
      %v478 = vsub.f32 0.0, %v477
      %v479 = vmul.f32 %v478, 1.442695
      %v480 = vpow.pop %v479
      %v481 = vadd.f32 %v480, 1.0
      %v482 = vrcp.pop %v481
      %v483 = vmul.f32 1.0, %v482
      %v484 = vtanh.pop %v477
      %486 = vrot.lane.b32.xlu0 %v397, 32
      %v487 = vpop.permute.xlu0 %486
      %v489 = vmul.f32 %v483, %v487
      %491 = vrot.lane.b32.xlu0 %v484, 64
      %v492 = vpop.permute.xlu0 %491
      %v494 = vmul.f32 %v483, %v492
      %496 = vrot.lane.b32.xlu0 %v494, 32
      %v497 = vpop.permute.xlu0 %496
      %v499 = vadd.f32 %v489, %v497
      %v500 = vtanh.pop %v499
      %502 = vrot.lane.b32.xlu0 %v500, 64
      %v503 = vpop.permute.xlu0 %502
      %v505 = vmul.f32 %v483, %v503
      %507 = vrot.lane.b32.xlu0 %v505, 32
      %v508 = vpop.permute.xlu0 %507
      %s510 = scalar_lea.vmem [#allocation11], %s391
      %vm511 = vcmask 253952
      %512 = vst.msk [vmem:[%s510] sm:$0x1] %vm511, %v508
      %514 = vrot.lane.b32.xlu0 %v499, 96
      %v515 = vpop.permute.xlu0 %514
    $region69: #{tpu_custom_call.1} parent=1 // loop_footer
      %s395 = sadd.s32 1, %s391
    $region70: #{tpu_custom_call.1} parent=1 // loop_footer_branch
      %390 = sbr.rel target = $region66
    $region71: #{tpu_custom_call.1} parent=1 // loop_exit
      _
    %vm517 = vcmask 253952
    %518 = vst.msk [vmem:[#allocation13] sm:$0x1] %vm517, %v179
    %519 = vst.msk [vmem:[#allocation13 + $0x1] sm:$0x1] %vm517, %v396
    %520 = vst.msk [vmem:[#allocation14] sm:$0x1] %vm517, %v180
    %521 = vst.msk [vmem:[#allocation14 + $0x1] sm:$0x1] %vm517, %v397
    %v522 = vld [vmem:[#allocation11] sm:$0xff]
    %v523 = vld [vmem:[%s7] sm:$0xff]
    %v524 = vld [vmem:[%s7 + $0x8] sm:$0xff]
    %v525 = vld [vmem:[%s7 + $0x10] sm:$0xff]
    %v526 = vld [vmem:[%s7 + $0x18] sm:$0xff]
    %v527 = vld [vmem:[%s8] sm:$0x1]
    %v529 = vlaneseq
    %v530 = vshrl.u32 %v529, 7
    %v531 = vsub.s32 0, %v530
    %v532 = vrot.slane %v527, %v531
    %v535 = vsel %vm313, %v522, 0
    %537 = vmatprep.subr.mxu0 0.0
    %538 = vmatpush1.msra.mxu0 %v523
    %539 = vmatprep.subr.mxu0 0.0
    %540 = vmatpush1.msra.mxu0 %v524
    %541 = vmatprep.subr.mxu0 0.0
    %542 = vmatpush1.msra.mxu0 %v525
    %543 = vmatprep.subr.mxu0 0.0
    %544 = vmatpush1.msra.mxu0 %v526
    %545 = vmatprep.subr.mxu0 0.0
    %546 = vmatpush1.msra.mxu0 0.0
    %547 = vmatprep.subr.mxu0 0.0
    %548 = vmatpush1.msra.mxu0 0.0
    %549 = vmatprep.subr.mxu0 0.0
    %550 = vmatpush1.msra.mxu0 0.0
    %551 = vmatprep.subr.mxu0 0.0
    %552 = vmatpush1.msra.mxu0 0.0
    %553 = vmatprep.subr.mxu0 0.0
    %554 = vmatpush1.msra.mxu0 0.0
    %555 = vmatprep.subr.mxu0 0.0
    %556 = vmatpush1.msra.mxu0 0.0
    %557 = vmatprep.subr.mxu0 0.0
    %558 = vmatpush1.msra.mxu0 0.0
    %559 = vmatprep.subr.mxu0 0.0
    %560 = vmatpush1.msra.mxu0 0.0
    %561 = vmatprep.subr.mxu0 0.0
    %562 = vmatpush1.msra.mxu0 0.0
    %563 = vmatprep.subr.mxu0 0.0
    %564 = vmatpush1.msra.mxu0 0.0
    %565 = vmatprep.subr.mxu0 0.0
    %566 = vmatpush1.msra.mxu0 0.0
    %567 = vmatprep.subr.mxu0 0.0
    %568 = vmatpush1.msra.mxu0 0.0
    %569 = vmatprep.subr.mxu0 0.0
    %570 = vmatpush1.msra.mxu0 0.0
    %571 = vmatprep.subr.mxu0 0.0
    %572 = vmatpush1.msra.mxu0 0.0
    %573 = vmatprep.subr.mxu0 0.0
    %574 = vmatpush1.msra.mxu0 0.0
    %575 = vmatprep.subr.mxu0 0.0
    %576 = vmatpush1.msra.mxu0 0.0
    %577 = vmatprep.subr.mxu0 0.0
    %578 = vmatpush1.msra.mxu0 0.0
    %579 = vmatprep.subr.mxu0 0.0
    %580 = vmatpush1.msra.mxu0 0.0
    %581 = vmatprep.subr.mxu0 0.0
    %582 = vmatpush1.msra.mxu0 0.0
    %583 = vmatprep.subr.mxu0 0.0
    %584 = vmatpush1.msra.mxu0 0.0
    %585 = vmatprep.subr.mxu0 0.0
    %586 = vmatpush1.msra.mxu0 0.0
    %587 = vmatprep.subr.mxu0 0.0
    %588 = vmatpush1.msra.mxu0 0.0
    %589 = vmatprep.subr.mxu0 0.0
    %590 = vmatpush1.msra.mxu0 0.0
    %591 = vmatprep.subr.mxu0 0.0
    %592 = vmatpush1.msra.mxu0 0.0
    %593 = vmatprep.subr.mxu0 0.0
    %594 = vmatpush1.msra.mxu0 0.0
    %595 = vmatprep.subr.mxu0 0.0
    %596 = vmatpush1.msra.mxu0 0.0
    %597 = vmatprep.subr.mxu0 0.0
    %598 = vmatpush1.msra.mxu0 0.0
    %599 = vmatprep.subr.mxu0 0.0
    %600 = vmatpush1.msra.mxu0 0.0
    %601 = vmatprep.mubr.f32.mxu0 0.0
    %602 = vmatmul.mubr.f32.gmra.mrb[0].mxu0 %v535
    %v603 = vpop.f32.mrb[0].mxu0
    %v604 = vadd.f32 %v532, %v603
    %v605 = vpop.f32.mrb[0].mxu0
    %606 = vdwg.mxu0
    %vm607 = vcmask 64512
    %608 = vst.msk [vmem:[#allocation10] sm:$0xff] %vm607, %v604
    // Predicated region
    $region72: #{tpu_custom_call.1} parent=1 // pred_check
      _
    $region73: #{tpu_custom_call.1} parent=1 // pred_check_branch
      %610 = sbr.rel (0) target = $region75
    $region74: #{tpu_custom_call.1} parent=1 // pred_region
      %s612 = ssub.s32 128, 128
      %613 = vsyncadd [#allocation6], %s612
      %s615 = sshll.u32 [#allocation10], 4
      %s616 = int_to_ptr.vmem [resolvable:$true] %s615
      %618 = dma.vmem_to_hbm [thread:$0]  %s616, 128, %s11, [#allocation6]
    $region75: #{tpu_custom_call.1} parent=1 // pred_fallthru
      _
    // Predicated region
    $region76: #{tpu_custom_call.1} parent=1 // pred_check
      _
    $region77: #{tpu_custom_call.1} parent=1 // pred_check_branch
      %620 = sbr.rel (0) target = $region79
    $region78: #{tpu_custom_call.1} parent=1 // pred_region
      %s622 = ssub.s32 128, 128
      %623 = vsyncadd [#allocation12], %s622
      %s625 = sshll.u32 [#allocation11], 4
      %s626 = int_to_ptr.vmem [resolvable:$true] %s625
      %628 = dma.vmem_to_hbm [thread:$0]  %s626, 128, %s12, [#allocation12]
    $region79: #{tpu_custom_call.1} parent=1 // pred_fallthru
      _
    // Predicated region
    $region80: #{tpu_custom_call.1} parent=1 // pred_check
      _
    $region81: #{tpu_custom_call.1} parent=1 // pred_check_branch
      %630 = sbr.rel (0) target = $region83
    $region82: #{tpu_custom_call.1} parent=1 // pred_region
      %s632 = ssub.s32 32, 32
      %633 = vsyncadd [#allocation12], %s632
      %s635 = sshll.u32 [#allocation13], 4
      %s636 = int_to_ptr.vmem [resolvable:$true] %s635
      %638 = dma.vmem_to_hbm [thread:$0]  %s636, 32, %s13, [#allocation12]
    $region83: #{tpu_custom_call.1} parent=1 // pred_fallthru
      _
    // Predicated region
    $region84: #{tpu_custom_call.1} parent=1 // pred_check
      _
    $region85: #{tpu_custom_call.1} parent=1 // pred_check_branch
      %640 = sbr.rel (0) target = $region87
    $region86: #{tpu_custom_call.1} parent=1 // pred_region
      %s642 = ssub.s32 32, 32
      %643 = vsyncadd [#allocation15], %s642
      %s645 = sshll.u32 [#allocation14], 4
      %s646 = int_to_ptr.vmem [resolvable:$true] %s645
      %648 = dma.vmem_to_hbm [thread:$0]  %s646, 32, %s14, [#allocation15]
    $region87: #{tpu_custom_call.1} parent=1 // pred_fallthru
      _
    // Predicated region
    $region88: #{tpu_custom_call.1} parent=1 // pred_check
      _
    $region89: #{tpu_custom_call.1} parent=1 // pred_check_branch
      %650 = sbr.rel (0) target = $region91
    $region90: #{tpu_custom_call.1} parent=1 // pred_region
      %651 = dma.done [#allocation6], 128
    $region91: #{tpu_custom_call.1} parent=1 // pred_fallthru
      _
    // Predicated region
    $region92: #{tpu_custom_call.1} parent=1 // pred_check
      _
    $region93: #{tpu_custom_call.1} parent=1 // pred_check_branch
      %653 = sbr.rel (0) target = $region95
    $region94: #{tpu_custom_call.1} parent=1 // pred_region
      %654 = dma.done [#allocation12], 128
    $region95: #{tpu_custom_call.1} parent=1 // pred_fallthru
      _
    // Predicated region
    $region96: #{tpu_custom_call.1} parent=1 // pred_check
      _
    $region97: #{tpu_custom_call.1} parent=1 // pred_check_branch
      %656 = sbr.rel (0) target = $region99
    $region98: #{tpu_custom_call.1} parent=1 // pred_region
      %657 = dma.done [#allocation12], 32
    $region99: #{tpu_custom_call.1} parent=1 // pred_fallthru
      _
    // Predicated region
    $region100: #{tpu_custom_call.1} parent=1 // pred_check
      _
    $region101: #{tpu_custom_call.1} parent=1 // pred_check_branch
      %659 = sbr.rel (0) target = $region103
    $region102: #{tpu_custom_call.1} parent=1 // pred_region
      %660 = dma.done [#allocation15], 32
    $region103: #{tpu_custom_call.1} parent=1 // pred_fallthru
      _
    %661 = vsyncpa [#allocation5], 1
    %662 = vsyncpa [#allocation8], 1
    %663 = vsyncpa [#allocation6], 1
    %664 = vsyncpa [#allocation12], 1
    %665 = vsyncpa [#allocation15], 1

</llo_original>
